<compile_context>
chip_gen: v5e
topology: v5e:2x2
jax: 0.10.0
libtpu: 0.0.40
codegen_flags: <defaults>
</compile_context>

<pallas_src>
import functools

import numpy as np
import jax
import jax.numpy as jnp
from jax.experimental import pallas as pl
from jax.experimental.pallas import tpu as pltpu


def temporal_gated_kernel(x_ref, wf_ref, bf_ref, out_ref, *,
                          c_in, c_out, kt, t_out, compute_dtype):
    """Gated temporal conv on one row-block of (batch, node) rows.

    x_ref   : (tm, T*C_in)        f32, lanes time-major / channel-minor
    wf_ref  : (Kt*C_in, 2*C_out)  fused [W1 | W2] in compute_dtype
    bf_ref  : (1, 2*C_out)        f32 fused bias
    out_ref : (tm, T_out*C_out)   gated output, lanes time-major / channel-minor
    """
    x_f32 = x_ref[...]                      # single read of the activation tile
    x_mm = x_f32.astype(compute_dtype)      # MXU operands (bf16 fast path)
    w = wf_ref[...]
    b = bf_ref[...]
    k = kt * c_in

    outs = []
    # T_out is small for ST-GCN (a handful of frames): full static unroll keeps
    # every tap a *static* lane window of the VMEM-resident tile.
    # TODO(synk): for large T_out switch to a lane-blocked fori_loop.
    for t in range(t_out):
        win = x_mm[:, t * c_in: t * c_in + k]                  # (tm, Kt*C_in)
        z = jnp.dot(win, w, preferred_element_type=jnp.float32) + b
        z1 = z[:, :c_out]                                      # conv1
        z2 = z[:, c_out:]                                      # conv2 (gate)
        res = x_f32[:, (t + kt - 1) * c_in: (t + kt) * c_in]   # f32 skip path
        if c_out > c_in:                                       # channel zero-pad
            res = jnp.concatenate(
                [res, jnp.zeros((res.shape[0], c_out - c_in), jnp.float32)],
                axis=-1)
        outs.append((z1 + res) * jax.nn.sigmoid(z2))

    out = outs[0] if len(outs) == 1 else jnp.concatenate(outs, axis=-1)
    out_ref[...] = out.astype(out_ref.dtype)


def _round_up(x, m):
    return ((x + m - 1) // m) * m


def _choose_tile(n_rows, in_lanes, out_lanes, two_cout, k_rows,
                 w_bytes, out_bytes):
    """Pick (tm, vmem_limit_bytes) per TPU generation."""
    try:
        vmem_bytes = int(pltpu.get_tpu_info().vmem_capacity_bytes)
    except Exception:                        # unknown target: assume smallest
        vmem_bytes = 64 * 2**20

    if vmem_bytes <= 64 * 2**20:
        # v7x-like: 64 MiB/TC, 2 TensorCores share HBM -> give each core >= 4
        # pipeline steps and leave regalloc headroom.
        vmem_limit = min(vmem_bytes * 3 // 4, 48 * 2**20)
        min_steps = 8
    else:
        # v5e / v6e: one TensorCore, 128 MiB VMEM -> take the biggest tile the
        # budget allows; 2 steps are enough to overlap DMA with compute.
        vmem_limit = min(vmem_bytes // 2, 64 * 2**20)
        min_steps = 2

    # VMEM accounting with lane padding to 128: double-buffered x/out blocks,
    # double-buffered fused weight + bias, in-kernel compute-dtype copy and
    # f32 temporaries (review concern: these were previously omitted).
    in_lanes_p = _round_up(in_lanes, 128)
    out_lanes_p = _round_up(out_lanes, 128)
    two_cout_p = _round_up(two_cout, 128)
    fixed = 2 * (_round_up(k_rows, 8) * two_cout_p * w_bytes + two_cout_p * 4)
    per_row = (2 * in_lanes_p * 4             # x block, f32, double-buffered
               + 2 * out_lanes_p * out_bytes  # out block, double-buffered
               + in_lanes_p * w_bytes         # compute-dtype copy of x
               + out_lanes_p * 4              # f32 gated output before cast
               + 2 * two_cout_p * 4)          # z / sigmoid temporaries
    budget = max(vmem_limit - fixed, per_row) // 2   # 2x headroom
    tm = max(8, min(4096, budget // per_row))

    # Grid-step floor (only really shrinks tiles on v7x-like 2-TC targets).
    min_tm = max(8, n_rows // min_steps)
    while tm > min_tm and pl.cdiv(n_rows, tm) < min_steps:
        tm = max(min_tm, tm // 2)

    # Alignment: sublane floor of 8; 128-row alignment suffices on every
    # generation (the 256-wide v6e/v7x MXU constraint is on the lane/K dims,
    # not the row dim).
    tm -= tm % (128 if tm >= 128 else 8)
    tm = max(8, min(tm, _round_up(n_rows, 8)))
    return tm, int(vmem_limit)


def temporal_layer_pallas_cl(x_cl, w1, b1, w2, b2, Kt, C_out, *,
                             compute_dtype=jnp.bfloat16, out_dtype=None,
                             tm=None):
    """Channels-last TemporalLayer: x_cl (N, V, T, C_in) -> (N, V, T_out, C_out).

    Use this form between stacked ST-GCN layers so no NCHW<->channels-last
    transpose ever touches HBM.
    """
    N, V, T, C_in = x_cl.shape
    if C_out < C_in:
        raise ValueError("residual channel-pad requires C_out >= C_in "
                         "(same constraint as the PyTorch module's F.pad)")
    T_out = T - Kt + 1
    K = Kt * C_in
    R = N * V
    in_lanes = T * C_in
    out_lanes = T_out * C_out
    if out_dtype is None:
        out_dtype = x_cl.dtype

    x_rows = x_cl.reshape(R, in_lanes)        # free: (N,V,T,C) is contiguous

    def wmat(w):  # (C_out, C_in, 1, Kt) -> (Kt*C_in, C_out), row = kt*C_in + ci
        return jnp.transpose(w[:, :, 0, :], (2, 1, 0)).reshape(K, C_out)

    Wf = jnp.concatenate([wmat(w1), wmat(w2)], axis=1).astype(compute_dtype)
    Bf = jnp.concatenate([b1, b2]).reshape(1, 2 * C_out).astype(jnp.float32)

    auto_tm, vmem_limit = _choose_tile(
        R, in_lanes, out_lanes, 2 * C_out, K,
        np.dtype(compute_dtype).itemsize, np.dtype(out_dtype).itemsize)
    if tm is None:
        tm = auto_tm

    # Ragged tail handled by Pallas partial-block masking — no jnp.pad pass.
    grid = (pl.cdiv(R, tm),)

    kernel = functools.partial(
        temporal_gated_kernel, c_in=C_in, c_out=C_out, kt=Kt, t_out=T_out,
        compute_dtype=compute_dtype)

    cost = pl.CostEstimate(
        flops=2 * R * T_out * K * (2 * C_out),
        transcendentals=R * T_out * C_out,
        bytes_accessed=int(R * in_lanes * 4
                           + K * 2 * C_out * np.dtype(compute_dtype).itemsize
                           + 2 * C_out * 4
                           + R * out_lanes * np.dtype(out_dtype).itemsize))

    # TODO(synk): once compute-bound (large C), zero-pad K and 2*C_out up to
    # 256-lane multiples so v6e/v7x MXU pushes and vld's are full-width.
    out_rows = pl.pallas_call(
        kernel,
        out_shape=jax.ShapeDtypeStruct((R, out_lanes), out_dtype),
        grid_spec=pltpu.PrefetchScalarGridSpec(
            num_scalar_prefetch=0,
            grid=grid,
            in_specs=[
                pl.BlockSpec((tm, in_lanes), lambda i: (i, 0)),     # x rows
                pl.BlockSpec((K, 2 * C_out), lambda i: (0, 0)),     # fused W
                pl.BlockSpec((1, 2 * C_out), lambda i: (0, 0)),     # fused bias
            ],
            out_specs=pl.BlockSpec((tm, out_lanes), lambda i: (i, 0)),
        ),
        compiler_params=pltpu.CompilerParams(
            dimension_semantics=("parallel",),
            vmem_limit_bytes=vmem_limit),
        cost_estimate=cost,
    )(x_rows, Wf, Bf)

    return out_rows.reshape(N, V, T_out, C_out)


def temporal_layer_pallas(x, w1, b1, w2, b2, Kt, C_out, **kwargs):
    """NCHW wrapper matching the PyTorch module: (N, C_in, V, T) -> (N, C_out, V, T_out)."""
    # TODO(synk): in a full ST-GCN keep activations channels-last between
    # layers (call temporal_layer_pallas_cl directly) so these two boundary
    # transposes — a full HBM read+write pass each — disappear.
    x_cl = jnp.transpose(x, (0, 2, 3, 1))
    out_cl = temporal_layer_pallas_cl(x_cl, w1, b1, w2, b2, Kt, C_out, **kwargs)
    return jnp.transpose(out_cl, (0, 3, 1, 2))


def temporal_layer_ref(x, w1, b1, w2, b2, Kt, C_out):
    """Pure-JAX reference matching the PyTorch forward exactly."""
    dn = ("NCHW", "OIHW", "NCHW")
    c1 = jax.lax.conv_general_dilated(x, w1, (1, 1), "VALID",
                                      dimension_numbers=dn)
    c1 = c1 + b1[None, :, None, None]
    c2 = jax.lax.conv_general_dilated(x, w2, (1, 1), "VALID",
                                      dimension_numbers=dn)
    c2 = c2 + b2[None, :, None, None]
    res = x[:, :, :, Kt - 1:]
    res = jnp.pad(res, ((0, 0), (0, C_out - x.shape[1]), (0, 0), (0, 0)))
    return (c1 + res) * jax.nn.sigmoid(c2)


if __name__ == "__main__":
    # small shapes consistent with the module: batch=2, C_in=4, C_out=8,
    # V (graph nodes) = 16, T (time) = 8, Kt = 3
    N, C_in, C_out, V, T, Kt = 2, 4, 8, 16, 8, 3

    key = jax.random.PRNGKey(0)
    kx, k1, k2, k3, k4 = jax.random.split(key, 5)

    x = jax.random.normal(kx, (N, C_in, V, T), dtype=jnp.float32)
    w1 = jax.random.normal(k1, (C_out, C_in, 1, Kt), dtype=jnp.float32) * 0.1
    b1 = jax.random.normal(k2, (C_out,), dtype=jnp.float32) * 0.1
    w2 = jax.random.normal(k3, (C_out, C_in, 1, Kt), dtype=jnp.float32) * 0.1
    b2 = jax.random.normal(k4, (C_out,), dtype=jnp.float32) * 0.1

    ref = temporal_layer_ref(x, w1, b1, w2, b2, Kt, C_out)

    # exact path (f32 MXU inputs): tight check against the f32 reference
    fwd_f32 = jax.jit(functools.partial(
        temporal_layer_pallas, Kt=Kt, C_out=C_out, compute_dtype=jnp.float32))
    out_f32 = jax.block_until_ready(fwd_f32(x, w1, b1, w2, b2))
    assert out_f32.shape == (N, C_out, V, T - Kt + 1), out_f32.shape
    assert jnp.allclose(out_f32, ref, atol=1e-4, rtol=1e-4), "f32 mismatch"

    # fast path (bf16 MXU operands, f32 accumulation, f32 residual): looser tol
    fwd_bf16 = jax.jit(functools.partial(
        temporal_layer_pallas, Kt=Kt, C_out=C_out, compute_dtype=jnp.bfloat16))
    out_bf16 = jax.block_until_ready(fwd_bf16(x, w1, b1, w2, b2))
    assert out_bf16.shape == (N, C_out, V, T - Kt + 1), out_bf16.shape
    assert jnp.allclose(out_bf16, ref, atol=1e-1, rtol=1e-1), "bf16 mismatch"

    print("KERNEL_OK")
</pallas_src>

<mosaic_0001>
module attributes {stable_mosaic.version = 11 : i64} {
  func.func @temporal_gated_kernel(%arg0: i32, %arg1: memref<8x32xf32, #tpu.memory_space<vmem>>, %arg2: memref<12x16xf32, #tpu.memory_space<vmem>>, %arg3: memref<1x16xf32, #tpu.memory_space<vmem>>, %arg4: memref<8x48xf32, #tpu.memory_space<vmem>>) attributes {dimension_semantics = [#tpu.dimension_semantics<parallel>], iteration_bounds = array<i64: 4>, scalar_prefetch = 0 : i64, scratch_operands = 0 : i64, tpu.core_type = #tpu.core_type<tc>, window_params = [{transform_indices = @transform_0, window_bounds = array<i64: 8, 32>}, {pipeline_mode = #tpu.pipeline_mode<synchronous>, transform_indices = @transform_1, window_bounds = array<i64: 12, 16>}, {pipeline_mode = #tpu.pipeline_mode<synchronous>, transform_indices = @transform_2, window_bounds = array<i64: 1, 16>}, {transform_indices = @transform_3, window_bounds = array<i64: 8, 48>}]} {
    %c0 = arith.constant 0 : index
    %c0_0 = arith.constant 0 : index
    %0 = vector.load %arg1[%c0, %c0_0] : memref<8x32xf32, #tpu.memory_space<vmem>>, vector<8x32xf32>
    %c0_1 = arith.constant 0 : index
    %c0_2 = arith.constant 0 : index
    %1 = vector.load %arg2[%c0_1, %c0_2] : memref<12x16xf32, #tpu.memory_space<vmem>>, vector<12x16xf32>
    %c0_3 = arith.constant 0 : index
    %c0_4 = arith.constant 0 : index
    %2 = vector.load %arg3[%c0_3, %c0_4] : memref<1x16xf32, #tpu.memory_space<vmem>>, vector<1x16xf32>
    %3 = vector.extract_strided_slice %0 {offsets = [0, 0], sizes = [8, 12], strides = [1, 1]} : vector<8x32xf32> to vector<8x12xf32>
    %cst = arith.constant dense<0.000000e+00> : vector<8x16xf32>
    %4 = tpu.matmul %3, %1, %cst {dimension_numbers = #tpu.dot_dimension_numbers<[1], [0], [0], [1], [0, 0, 1, 1], [], []>} : vector<8x12xf32>, vector<12x16xf32>, vector<8x16xf32> -> vector<8x16xf32>
    %5 = vector.broadcast %2 : vector<1x16xf32> to vector<8x16xf32>
    %6 = arith.addf %4, %5 : vector<8x16xf32>
    %7 = vector.extract_strided_slice %6 {offsets = [0, 0], sizes = [8, 8], strides = [1, 1]} : vector<8x16xf32> to vector<8x8xf32>
    %8 = vector.extract_strided_slice %6 {offsets = [0, 8], sizes = [8, 8], strides = [1, 1]} : vector<8x16xf32> to vector<8x8xf32>
    %9 = vector.extract_strided_slice %0 {offsets = [0, 8], sizes = [8, 4], strides = [1, 1]} : vector<8x32xf32> to vector<8x4xf32>
    %cst_5 = arith.constant 0.000000e+00 : f32
    %10 = vector.broadcast %cst_5 : f32 to vector<8x4xf32>
    %11 = tpu.concatenate %9, %10 in 1 : vector<8x4xf32>, vector<8x4xf32> -> vector<8x8xf32>
    %12 = arith.addf %7, %11 : vector<8x8xf32>
    %13 = arith.negf %8 : vector<8x8xf32>
    %14 = math.exp %13 : vector<8x8xf32>
    %cst_6 = arith.constant 1.000000e+00 : f32
    %15 = vector.broadcast %cst_6 : f32 to vector<8x8xf32>
    %16 = arith.addf %15, %14 : vector<8x8xf32>
    %17 = arith.divf %15, %16 : vector<8x8xf32>
    %18 = arith.mulf %12, %17 : vector<8x8xf32>
    %19 = vector.extract_strided_slice %0 {offsets = [0, 4], sizes = [8, 12], strides = [1, 1]} : vector<8x32xf32> to vector<8x12xf32>
    %cst_7 = arith.constant dense<0.000000e+00> : vector<8x16xf32>
    %20 = tpu.matmul %19, %1, %cst_7 {dimension_numbers = #tpu.dot_dimension_numbers<[1], [0], [0], [1], [0, 0, 1, 1], [], []>} : vector<8x12xf32>, vector<12x16xf32>, vector<8x16xf32> -> vector<8x16xf32>
    %21 = vector.broadcast %2 : vector<1x16xf32> to vector<8x16xf32>
    %22 = arith.addf %20, %21 : vector<8x16xf32>
    %23 = vector.extract_strided_slice %22 {offsets = [0, 0], sizes = [8, 8], strides = [1, 1]} : vector<8x16xf32> to vector<8x8xf32>
    %24 = vector.extract_strided_slice %22 {offsets = [0, 8], sizes = [8, 8], strides = [1, 1]} : vector<8x16xf32> to vector<8x8xf32>
    %25 = vector.extract_strided_slice %0 {offsets = [0, 12], sizes = [8, 4], strides = [1, 1]} : vector<8x32xf32> to vector<8x4xf32>
    %cst_8 = arith.constant 0.000000e+00 : f32
    %26 = vector.broadcast %cst_8 : f32 to vector<8x4xf32>
    %27 = tpu.concatenate %25, %26 in 1 : vector<8x4xf32>, vector<8x4xf32> -> vector<8x8xf32>
    %28 = arith.addf %23, %27 : vector<8x8xf32>
    %29 = arith.negf %24 : vector<8x8xf32>
    %30 = math.exp %29 : vector<8x8xf32>
    %cst_9 = arith.constant 1.000000e+00 : f32
    %31 = vector.broadcast %cst_9 : f32 to vector<8x8xf32>
    %32 = arith.addf %31, %30 : vector<8x8xf32>
    %33 = arith.divf %31, %32 : vector<8x8xf32>
    %34 = arith.mulf %28, %33 : vector<8x8xf32>
    %35 = vector.extract_strided_slice %0 {offsets = [0, 8], sizes = [8, 12], strides = [1, 1]} : vector<8x32xf32> to vector<8x12xf32>
    %cst_10 = arith.constant dense<0.000000e+00> : vector<8x16xf32>
    %36 = tpu.matmul %35, %1, %cst_10 {dimension_numbers = #tpu.dot_dimension_numbers<[1], [0], [0], [1], [0, 0, 1, 1], [], []>} : vector<8x12xf32>, vector<12x16xf32>, vector<8x16xf32> -> vector<8x16xf32>
    %37 = vector.broadcast %2 : vector<1x16xf32> to vector<8x16xf32>
    %38 = arith.addf %36, %37 : vector<8x16xf32>
    %39 = vector.extract_strided_slice %38 {offsets = [0, 0], sizes = [8, 8], strides = [1, 1]} : vector<8x16xf32> to vector<8x8xf32>
    %40 = vector.extract_strided_slice %38 {offsets = [0, 8], sizes = [8, 8], strides = [1, 1]} : vector<8x16xf32> to vector<8x8xf32>
    %41 = vector.extract_strided_slice %0 {offsets = [0, 16], sizes = [8, 4], strides = [1, 1]} : vector<8x32xf32> to vector<8x4xf32>
    %cst_11 = arith.constant 0.000000e+00 : f32
    %42 = vector.broadcast %cst_11 : f32 to vector<8x4xf32>
    %43 = tpu.concatenate %41, %42 in 1 : vector<8x4xf32>, vector<8x4xf32> -> vector<8x8xf32>
    %44 = arith.addf %39, %43 : vector<8x8xf32>
    %45 = arith.negf %40 : vector<8x8xf32>
    %46 = math.exp %45 : vector<8x8xf32>
    %cst_12 = arith.constant 1.000000e+00 : f32
    %47 = vector.broadcast %cst_12 : f32 to vector<8x8xf32>
    %48 = arith.addf %47, %46 : vector<8x8xf32>
    %49 = arith.divf %47, %48 : vector<8x8xf32>
    %50 = arith.mulf %44, %49 : vector<8x8xf32>
    %51 = vector.extract_strided_slice %0 {offsets = [0, 12], sizes = [8, 12], strides = [1, 1]} : vector<8x32xf32> to vector<8x12xf32>
    %cst_13 = arith.constant dense<0.000000e+00> : vector<8x16xf32>
    %52 = tpu.matmul %51, %1, %cst_13 {dimension_numbers = #tpu.dot_dimension_numbers<[1], [0], [0], [1], [0, 0, 1, 1], [], []>} : vector<8x12xf32>, vector<12x16xf32>, vector<8x16xf32> -> vector<8x16xf32>
    %53 = vector.broadcast %2 : vector<1x16xf32> to vector<8x16xf32>
    %54 = arith.addf %52, %53 : vector<8x16xf32>
    %55 = vector.extract_strided_slice %54 {offsets = [0, 0], sizes = [8, 8], strides = [1, 1]} : vector<8x16xf32> to vector<8x8xf32>
    %56 = vector.extract_strided_slice %54 {offsets = [0, 8], sizes = [8, 8], strides = [1, 1]} : vector<8x16xf32> to vector<8x8xf32>
    %57 = vector.extract_strided_slice %0 {offsets = [0, 20], sizes = [8, 4], strides = [1, 1]} : vector<8x32xf32> to vector<8x4xf32>
    %cst_14 = arith.constant 0.000000e+00 : f32
    %58 = vector.broadcast %cst_14 : f32 to vector<8x4xf32>
    %59 = tpu.concatenate %57, %58 in 1 : vector<8x4xf32>, vector<8x4xf32> -> vector<8x8xf32>
    %60 = arith.addf %55, %59 : vector<8x8xf32>
    %61 = arith.negf %56 : vector<8x8xf32>
    %62 = math.exp %61 : vector<8x8xf32>
    %cst_15 = arith.constant 1.000000e+00 : f32
    %63 = vector.broadcast %cst_15 : f32 to vector<8x8xf32>
    %64 = arith.addf %63, %62 : vector<8x8xf32>
    %65 = arith.divf %63, %64 : vector<8x8xf32>
    %66 = arith.mulf %60, %65 : vector<8x8xf32>
    %67 = vector.extract_strided_slice %0 {offsets = [0, 16], sizes = [8, 12], strides = [1, 1]} : vector<8x32xf32> to vector<8x12xf32>
    %cst_16 = arith.constant dense<0.000000e+00> : vector<8x16xf32>
    %68 = tpu.matmul %67, %1, %cst_16 {dimension_numbers = #tpu.dot_dimension_numbers<[1], [0], [0], [1], [0, 0, 1, 1], [], []>} : vector<8x12xf32>, vector<12x16xf32>, vector<8x16xf32> -> vector<8x16xf32>
    %69 = vector.broadcast %2 : vector<1x16xf32> to vector<8x16xf32>
    %70 = arith.addf %68, %69 : vector<8x16xf32>
    %71 = vector.extract_strided_slice %70 {offsets = [0, 0], sizes = [8, 8], strides = [1, 1]} : vector<8x16xf32> to vector<8x8xf32>
    %72 = vector.extract_strided_slice %70 {offsets = [0, 8], sizes = [8, 8], strides = [1, 1]} : vector<8x16xf32> to vector<8x8xf32>
    %73 = vector.extract_strided_slice %0 {offsets = [0, 24], sizes = [8, 4], strides = [1, 1]} : vector<8x32xf32> to vector<8x4xf32>
    %cst_17 = arith.constant 0.000000e+00 : f32
    %74 = vector.broadcast %cst_17 : f32 to vector<8x4xf32>
    %75 = tpu.concatenate %73, %74 in 1 : vector<8x4xf32>, vector<8x4xf32> -> vector<8x8xf32>
    %76 = arith.addf %71, %75 : vector<8x8xf32>
    %77 = arith.negf %72 : vector<8x8xf32>
    %78 = math.exp %77 : vector<8x8xf32>
    %cst_18 = arith.constant 1.000000e+00 : f32
    %79 = vector.broadcast %cst_18 : f32 to vector<8x8xf32>
    %80 = arith.addf %79, %78 : vector<8x8xf32>
    %81 = arith.divf %79, %80 : vector<8x8xf32>
    %82 = arith.mulf %76, %81 : vector<8x8xf32>
    %83 = vector.extract_strided_slice %0 {offsets = [0, 20], sizes = [8, 12], strides = [1, 1]} : vector<8x32xf32> to vector<8x12xf32>
    %cst_19 = arith.constant dense<0.000000e+00> : vector<8x16xf32>
    %84 = tpu.matmul %83, %1, %cst_19 {dimension_numbers = #tpu.dot_dimension_numbers<[1], [0], [0], [1], [0, 0, 1, 1], [], []>} : vector<8x12xf32>, vector<12x16xf32>, vector<8x16xf32> -> vector<8x16xf32>
    %85 = vector.broadcast %2 : vector<1x16xf32> to vector<8x16xf32>
    %86 = arith.addf %84, %85 : vector<8x16xf32>
    %87 = vector.extract_strided_slice %86 {offsets = [0, 0], sizes = [8, 8], strides = [1, 1]} : vector<8x16xf32> to vector<8x8xf32>
    %88 = vector.extract_strided_slice %86 {offsets = [0, 8], sizes = [8, 8], strides = [1, 1]} : vector<8x16xf32> to vector<8x8xf32>
    %89 = vector.extract_strided_slice %0 {offsets = [0, 28], sizes = [8, 4], strides = [1, 1]} : vector<8x32xf32> to vector<8x4xf32>
    %cst_20 = arith.constant 0.000000e+00 : f32
    %90 = vector.broadcast %cst_20 : f32 to vector<8x4xf32>
    %91 = tpu.concatenate %89, %90 in 1 : vector<8x4xf32>, vector<8x4xf32> -> vector<8x8xf32>
    %92 = arith.addf %87, %91 : vector<8x8xf32>
    %93 = arith.negf %88 : vector<8x8xf32>
    %94 = math.exp %93 : vector<8x8xf32>
    %cst_21 = arith.constant 1.000000e+00 : f32
    %95 = vector.broadcast %cst_21 : f32 to vector<8x8xf32>
    %96 = arith.addf %95, %94 : vector<8x8xf32>
    %97 = arith.divf %95, %96 : vector<8x8xf32>
    %98 = arith.mulf %92, %97 : vector<8x8xf32>
    %99 = tpu.concatenate %18, %34, %50, %66, %82, %98 in 1 : vector<8x8xf32>, vector<8x8xf32>, vector<8x8xf32>, vector<8x8xf32>, vector<8x8xf32>, vector<8x8xf32> -> vector<8x48xf32>
    %c0_22 = arith.constant 0 : index
    %c0_23 = arith.constant 0 : index
    %100 = vector.load %arg4[%c0_22, %c0_23] : memref<8x48xf32, #tpu.memory_space<vmem>>, vector<8x48xf32>
    tpu.vector_store %arg4[%c0_22, %c0_23], %99 {strides = array<i32>} : memref<8x48xf32, #tpu.memory_space<vmem>>, vector<8x48xf32>,
    return
  }
  func.func @transform_0(%arg0: i32) -> (i32, i32) {
    %c0_i32 = arith.constant 0 : i32
    %c0_i32_0 = arith.constant 0 : i32
    return %arg0, %c0_i32 : i32, i32
  }
  func.func @transform_1(%arg0: i32) -> (i32, i32) {
    %c0_i32 = arith.constant 0 : i32
    %c0_i32_0 = arith.constant 0 : i32
    %c0_i32_1 = arith.constant 0 : i32
    return %c0_i32, %c0_i32_0 : i32, i32
  }
  func.func @transform_2(%arg0: i32) -> (i32, i32) {
    %c0_i32 = arith.constant 0 : i32
    %c0_i32_0 = arith.constant 0 : i32
    %c0_i32_1 = arith.constant 0 : i32
    return %c0_i32, %c0_i32_0 : i32, i32
  }
  func.func @transform_3(%arg0: i32) -> (i32, i32) {
    %c0_i32 = arith.constant 0 : i32
    %c0_i32_0 = arith.constant 0 : i32
    return %arg0, %c0_i32 : i32, i32
  }
}

</mosaic_0001>

<llo_original>
// kernel: temporal_layer_pallas.1
$region0: #{temporal_layer_pallas.1}
  #allocation0 [shape = 'u32[]', space=smem, size = 0x4, offset = 0x4, fixed_abs, tag = 'smem constant byte address 0x4 - core index']
  #allocation1 [shape = 'u32[72,128]{1,0:T(1,128)}', space=vmem, size = 0x9000, scoped, tag = 'internal scratch']
  %s0 = inlined_call_operand.vmem [shape: f32[32,32], index: 0, kind: input, shape index: {}]
  %s1 = inlined_call_operand.vmem [shape: f32[12,16], index: 1, kind: input, shape index: {}]
  %s2 = inlined_call_operand.vmem [shape: f32[1,16], index: 2, kind: input, shape index: {}]
  %s3 = inlined_call_operand.vmem [shape: f32[32,48], index: 3, kind: output, shape index: {}]
  %s4 = sld [smem:[#allocation0]]
  $region45: #{temporal_layer_pallas.1} parent=0
    _
  %s6 = ssub.s32 1, %s4
  %s7 = scalar_select 0, %s6, %s4
  loop: start=0, step=1, limit=6
  $region2: #{temporal_layer_pallas.1} parent=0 // loop_pre_header
    _
  $region3: #{temporal_layer_pallas.1} parent=0 // loop_header
    %s9 = sphi 0, %s13
    %p10 = scmp.ge.s32.totalorder %s9, 6
    %s19 = sphi 0, %s21
    %s22 = sphi 0, %s19
    %s23 = sphi 0, %s22
    %s39 = sphi 0, %s23
    %s43 = sphi 0, %s43
    %s45 = sphi 0, %s43
    %s46 = sphi 0, %s45
    %s60 = sphi 0, %s46
    %s64 = sphi 0, %s64
    %s66 = sphi 0, %s64
    %s67 = sphi 0, %s66
    %s81 = sphi 0, %s67
    %s87 = sphi 0, %s89
    %s90 = sphi 0, %s87
    %s91 = sphi 0, %s90
    %s107 = sphi 0, %s91
  $region4: #{temporal_layer_pallas.1} parent=0 // loop_header_branch
    %12 = sbr.rel (%p10) target = $region8
  $region5: #{temporal_layer_pallas.1} parent=0 // loop_body
    %s14 = ssub.s32 %s9, 1
    %s15 = ssub.s32 %s9, 2
    %s16 = sadd.s32 %s9, 1
    %s17 = ssub.s32 %s9, %s16
    %p18 = scmp.eq.s32.totalorder %s17, 0
    %s20 = sadd.s32 %s19, 1
    %s21 = scalar_select %p18, %s19, %s20
    %p24 = pneg %p18
    %p25 = scmp.eq.s32.totalorder %s9, 3
    %p26 = por %p24, %p25
    %p27 = scmp.ne.s32.totalorder %s19, %s22
    %p28 = scmp.eq.s32.totalorder %s9, 0
    %p29 = por %p27, %p28
    %p30 = scmp.ne.s32.totalorder %s19, %s22
    %p31 = scmp.eq.s32.totalorder %s14, 3
    %p32 = por %p30, %p31
    %p33 = scmp.ne.s32.totalorder %s22, %s23
    %p34 = scmp.eq.s32.totalorder %s14, 0
    %p35 = por %p33, %p34
    %p36 = scmp.ne.s32.totalorder %s22, %s23
    %p37 = scmp.eq.s32.totalorder %s15, 3
    %p38 = por %p36, %p37
    %p40 = scmp.ne.s32.totalorder %s23, %s39
    %p41 = scmp.eq.s32.totalorder %s15, 0
    %p42 = por %p40, %p41
    %s44 = sadd.s32 %s43, 1
    %p47 = scmp.eq.s32.totalorder %s9, 3
    %p48 = scmp.ne.s32.totalorder %s43, %s45
    %p49 = scmp.eq.s32.totalorder %s9, 0
    %p50 = por %p48, %p49
    %p51 = scmp.ne.s32.totalorder %s43, %s45
    %p52 = scmp.eq.s32.totalorder %s14, 3
    %p53 = por %p51, %p52
    %p54 = scmp.ne.s32.totalorder %s45, %s46
    %p55 = scmp.eq.s32.totalorder %s14, 0
    %p56 = por %p54, %p55
    %p57 = scmp.ne.s32.totalorder %s45, %s46
    %p58 = scmp.eq.s32.totalorder %s15, 3
    %p59 = por %p57, %p58
    %p61 = scmp.ne.s32.totalorder %s46, %s60
    %p62 = scmp.eq.s32.totalorder %s15, 0
    %p63 = por %p61, %p62
    %s65 = sadd.s32 %s64, 1
    %p68 = scmp.eq.s32.totalorder %s9, 3
    %p69 = scmp.ne.s32.totalorder %s64, %s66
    %p70 = scmp.eq.s32.totalorder %s9, 0
    %p71 = por %p69, %p70
    %p72 = scmp.ne.s32.totalorder %s64, %s66
    %p73 = scmp.eq.s32.totalorder %s14, 3
    %p74 = por %p72, %p73
    %p75 = scmp.ne.s32.totalorder %s66, %s67
    %p76 = scmp.eq.s32.totalorder %s14, 0
    %p77 = por %p75, %p76
    %p78 = scmp.ne.s32.totalorder %s66, %s67
    %p79 = scmp.eq.s32.totalorder %s15, 3
    %p80 = por %p78, %p79
    %p82 = scmp.ne.s32.totalorder %s67, %s81
    %p83 = scmp.eq.s32.totalorder %s15, 0
    %p84 = por %p82, %p83
    %s85 = ssub.s32 %s9, %s16
    %p86 = scmp.eq.s32.totalorder %s85, 0
    %s88 = sadd.s32 %s87, 1
    %s89 = scalar_select %p86, %s87, %s88
    %p92 = pneg %p86
    %p93 = scmp.eq.s32.totalorder %s9, 3
    %p94 = por %p92, %p93
    %p95 = scmp.ne.s32.totalorder %s87, %s90
    %p96 = scmp.eq.s32.totalorder %s9, 0
    %p97 = por %p95, %p96
    %p98 = scmp.ne.s32.totalorder %s87, %s90
    %p99 = scmp.eq.s32.totalorder %s14, 3
    %p100 = por %p98, %p99
    %p101 = scmp.ne.s32.totalorder %s90, %s91
    %p102 = scmp.eq.s32.totalorder %s14, 0
    %p103 = por %p101, %p102
    %p104 = scmp.ne.s32.totalorder %s90, %s91
    %p105 = scmp.eq.s32.totalorder %s15, 3
    %p106 = por %p104, %p105
    %p108 = scmp.ne.s32.totalorder %s91, %s107
    %p109 = scmp.eq.s32.totalorder %s15, 0
    %p110 = por %p108, %p109
    %p111 = scmp.le.s32.totalorder 1, %s9
    %p112 = scmp.lt.s32.totalorder %s9, 5
    %p113 = pnand %p111, %p112
    %p114 = pneg %p113
    // Predicated region
    $region9: #{temporal_layer_pallas.1} parent=5 // pred_check
      _
    $region10: #{temporal_layer_pallas.1} parent=5 // pred_check_branch
      %116 = sbr.rel (%p113) target = $region12
    $region11: #{temporal_layer_pallas.1} parent=5 // pred_region
      %s117 = ssub.s32 %s9, 1
      // Predicated region
      $region13: #{temporal_layer_pallas.1} parent=11 // pred_check
        %p118 = pneg %p56
      $region14: #{temporal_layer_pallas.1} parent=11 // pred_check_branch
        %120 = sbr.rel (%p118) target = $region16
      $region15: #{temporal_layer_pallas.1} parent=11 // pred_region
        _
      $region16: #{temporal_layer_pallas.1} parent=11 // pred_fallthru
        _
      // Predicated region
      $region17: #{temporal_layer_pallas.1} parent=11 // pred_check
        %p121 = pneg %p77
      $region18: #{temporal_layer_pallas.1} parent=11 // pred_check_branch
        %123 = sbr.rel (%p121) target = $region20
      $region19: #{temporal_layer_pallas.1} parent=11 // pred_region
        _
      $region20: #{temporal_layer_pallas.1} parent=11 // pred_fallthru
        _
    $region12: #{temporal_layer_pallas.1} parent=5 // pred_fallthru
      _
    %p124 = scmp.lt.s32.totalorder %s9, 4
    // Predicated region
    $region21: #{temporal_layer_pallas.1} parent=5 // pred_check
      %p125 = pneg %p124
    $region22: #{temporal_layer_pallas.1} parent=5 // pred_check_branch
      %127 = sbr.rel (%p125) target = $region24
    $region23: #{temporal_layer_pallas.1} parent=5 // pred_region
      // Predicated region
      $region25: #{temporal_layer_pallas.1} parent=23 // pred_check
        %p128 = pneg %p29
      $region26: #{temporal_layer_pallas.1} parent=23 // pred_check_branch
        %130 = sbr.rel (%p128) target = $region28
      $region27: #{temporal_layer_pallas.1} parent=23 // pred_region
        %p131 = scmp.lt.s32.totalorder %s9, 3
        %s132 = scalar_select %p131, %s9, 3
        %s133 = smul.addr %s132, 8
        %s134 = scalar_lea.vmem %s0, %s133
      $region28: #{temporal_layer_pallas.1} parent=23 // pred_fallthru
        _
    $region24: #{temporal_layer_pallas.1} parent=5 // pred_fallthru
      _
    %p135 = scmp.le.s32.totalorder 1, %s9
    %p136 = scmp.lt.s32.totalorder %s9, 5
    %p137 = pnand %p135, %p136
    %p138 = pneg %p137
    // Predicated region
    $region29: #{temporal_layer_pallas.1} parent=5 // pred_check
      _
    $region30: #{temporal_layer_pallas.1} parent=5 // pred_check_branch
      %140 = sbr.rel (%p137) target = $region32
    $region31: #{temporal_layer_pallas.1} parent=5 // pred_region
      %s141 = ssub.s32 %s9, 1
      %p142 = scmp.lt.s32.totalorder %s14, 3
      %s143 = scalar_select %p142, %s14, 3
      %s144 = smul.addr %s143, 8
      %s145 = scalar_lea.vmem %s0, %s144
      %p146 = pneg %p35
      %p147 = pneg %p32
      %p148 = pneg %p56
      %p149 = pneg %p53
      %p150 = pneg %p77
      %p151 = pneg %p74
      %p152 = pneg %p103
      %p153 = pneg %p100
      %p154 = scmp.lt.s32.totalorder %s14, 3
      %s155 = scalar_select %p154, %s14, 3
      %s156 = smul.addr %s155, 8
      %s157 = scalar_lea.vmem %s3, %s156
      %p158 = scmp.lt.s32.totalorder %s14, 3
      %s159 = scalar_select %p158, %s14, 3
      %s160 = smul.addr %s159, 8
      %s161 = scalar_lea.vmem %s0, %s160
      %p162 = scmp.lt.s32.totalorder %s14, 3
      %s163 = scalar_select %p162, %s14, 3
      %s164 = smul.addr %s163, 8
      %s165 = scalar_lea.vmem %s3, %s164
      %v166 = vld [vmem:[%s161] sm:$0xff]
      %v167 = vld [vmem:[%s1] sm:$0xff]
      %v168 = vld [vmem:[%s1 + $0x8] sm:$0xf]
      %v169 = vld [vmem:[%s2] sm:$0x1]
      %v171 = vperm.slane %v169, 0
      %vm173 = vcmask 97280
      %v175 = vsel %vm173, %v166, 0
      %vm177 = vcmask 1043456
      %v179 = vsel %vm177, %v168, 0
      %181 = vmatpush.msra.mxu0 0.0
      %182 = vmatpush.msra.mxu0 0.0
      %183 = vmatpush.msra.mxu0 0.0
      %184 = vmatpush.msra.mxu0 0.0
      %185 = vmatpush.msra.mxu0 0.0
      %186 = vmatpush.msra.mxu0 0.0
      %187 = vmatpush.msra.mxu0 0.0
      %188 = vmatpush.msra.mxu0 0.0
      %189 = vmatpush.msra.mxu0 0.0
      %190 = vmatpush.msra.mxu0 0.0
      %191 = vmatpush.msra.mxu0 0.0
      %192 = vmatpush.msra.mxu0 0.0
      %193 = vmatpush.msra.mxu0 0.0
      %194 = vmatpush.msra.mxu0 0.0
      %195 = vmatpush.msra.mxu0 %v179
      %196 = vmatpush.msra.mxu0 %v167
      %197 = vmatmul.f32.gmra.mxu0 %v175
      %v198 = vpop.f32.mrf.mxu0
      %v199 = vadd.f32 %v171, %v198
      %200 = vdwg.mxu0
      %201 = vrot.lane.b32.xlu0 %v166, 120
      %v202 = vpop.permute.xlu0 %201
      %vm204 = vcmask 31744
      %v205 = vsel %vm204, %v202, 0.0
      %v206 = vadd.f32 %v199, %v205
      %v207 = vxor.u32 %v199, 2147483648
      %v208 = vmul.f32 %v207, 1.442695
      %v209 = vpow.pop %v208
      %v210 = vadd.f32 %v209, 1.0
      %v211 = vrcp.pop %v210
      %v212 = vmul.f32 %v210, %v211
      %v213 = vsub.f32 1.0, %v212
      %v214 = vmul.f32 %v211, %v213
      %v215 = vadd.f32 %v211, %v214
      %vm216 = vweird.f32 %v210
      %vm217 = vweird.f32 %v211
      %vm218 = vmor %vm216, %vm217
      %v219 = vsel %vm218, %v211, %v215
      %v220 = vand.u32 2147483647, %v210
      %vm221 = vcmp.eq.f32.partialorder %v220, 8.507059e+37
      %v222 = vand.u32 %v210, 2147483648
      %v223 = vor.u32 1.1754944e-38, %v222
      %v224 = vsel %vm221, %v223, %v219
      %v225 = vmul.f32 1.0, %v224
      %227 = vrot.lane.b32.xlu0 %v225, 120
      %v228 = vpop.permute.xlu0 %227
      %v230 = vmul.f32 %v206, %v228
      %231 = vrot.lane.b32.xlu0 %v166, 124
      %v232 = vpop.permute.xlu0 %231
      %v233 = vsel %vm173, %v232, 0
      %235 = vmatpush.msra.mxu0 0.0
      %236 = vmatpush.msra.mxu0 0.0
      %237 = vmatpush.msra.mxu0 0.0
      %238 = vmatpush.msra.mxu0 0.0
      %239 = vmatpush.msra.mxu0 0.0
      %240 = vmatpush.msra.mxu0 0.0
      %241 = vmatpush.msra.mxu0 0.0
      %242 = vmatpush.msra.mxu0 0.0
      %243 = vmatpush.msra.mxu0 0.0
      %244 = vmatpush.msra.mxu0 0.0
      %245 = vmatpush.msra.mxu0 0.0
      %246 = vmatpush.msra.mxu0 0.0
      %247 = vmatpush.msra.mxu0 0.0
      %248 = vmatpush.msra.mxu0 0.0
      %249 = vmatpush.msra.mxu0 %v179
      %250 = vmatpush.msra.mxu0 %v167
      %251 = vmatmul.f32.gmra.mxu0 %v233
      %v252 = vpop.f32.mrf.mxu0
      %v253 = vadd.f32 %v171, %v252
      %254 = vdwg.mxu0
      %255 = vrot.lane.b32.xlu0 %v166, 116
      %v256 = vpop.permute.xlu0 %255
      %v258 = vsel %vm204, %v256, 0.0
      %v259 = vadd.f32 %v253, %v258
      %v260 = vxor.u32 %v253, 2147483648
      %v261 = vmul.f32 %v260, 1.442695
      %v262 = vpow.pop %v261
      %v263 = vadd.f32 %v262, 1.0
      %v264 = vrcp.pop %v263
      %v265 = vmul.f32 %v263, %v264
      %v266 = vsub.f32 1.0, %v265
      %v267 = vmul.f32 %v264, %v266
      %v268 = vadd.f32 %v264, %v267
      %vm269 = vweird.f32 %v263
      %vm270 = vweird.f32 %v264
      %vm271 = vmor %vm269, %vm270
      %v272 = vsel %vm271, %v264, %v268
      %v273 = vand.u32 2147483647, %v263
      %vm274 = vcmp.eq.f32.partialorder %v273, 8.507059e+37
      %v275 = vand.u32 %v263, 2147483648
      %v276 = vor.u32 1.1754944e-38, %v275
      %v277 = vsel %vm274, %v276, %v272
      %v278 = vmul.f32 1.0, %v277
      %280 = vrot.lane.b32.xlu0 %v278, 120
      %v281 = vpop.permute.xlu0 %280
      %v283 = vmul.f32 %v259, %v281
      %v284 = vsel %vm173, %v202, 0
      %286 = vmatpush.msra.mxu0 0.0
      %287 = vmatpush.msra.mxu0 0.0
      %288 = vmatpush.msra.mxu0 0.0
      %289 = vmatpush.msra.mxu0 0.0
      %290 = vmatpush.msra.mxu0 0.0
      %291 = vmatpush.msra.mxu0 0.0
      %292 = vmatpush.msra.mxu0 0.0
      %293 = vmatpush.msra.mxu0 0.0
      %294 = vmatpush.msra.mxu0 0.0
      %295 = vmatpush.msra.mxu0 0.0
      %296 = vmatpush.msra.mxu0 0.0
      %297 = vmatpush.msra.mxu0 0.0
      %298 = vmatpush.msra.mxu0 0.0
      %299 = vmatpush.msra.mxu0 0.0
      %300 = vmatpush.msra.mxu0 %v179
      %301 = vmatpush.msra.mxu0 %v167
      %302 = vmatmul.f32.gmra.mxu0 %v284
      %v303 = vpop.f32.mrf.mxu0
      %v304 = vadd.f32 %v171, %v303
      %305 = vdwg.mxu0
      %306 = vrot.lane.b32.xlu0 %v166, 112
      %v307 = vpop.permute.xlu0 %306
      %v309 = vsel %vm204, %v307, 0.0
      %v310 = vadd.f32 %v304, %v309
      %v311 = vxor.u32 %v304, 2147483648
      %v312 = vmul.f32 %v311, 1.442695
      %v313 = vpow.pop %v312
      %v314 = vadd.f32 %v313, 1.0
      %v315 = vrcp.pop %v314
      %v316 = vmul.f32 %v314, %v315
      %v317 = vsub.f32 1.0, %v316
      %v318 = vmul.f32 %v315, %v317
      %v319 = vadd.f32 %v315, %v318
      %vm320 = vweird.f32 %v314
      %vm321 = vweird.f32 %v315
      %vm322 = vmor %vm320, %vm321
      %v323 = vsel %vm322, %v315, %v319
      %v324 = vand.u32 2147483647, %v314
      %vm325 = vcmp.eq.f32.partialorder %v324, 8.507059e+37
      %v326 = vand.u32 %v314, 2147483648
      %v327 = vor.u32 1.1754944e-38, %v326
      %v328 = vsel %vm325, %v327, %v323
      %v329 = vmul.f32 1.0, %v328
      %331 = vrot.lane.b32.xlu0 %v329, 120
      %v332 = vpop.permute.xlu0 %331
      %v334 = vmul.f32 %v310, %v332
      %v335 = vsel %vm173, %v256, 0
      %337 = vmatpush.msra.mxu0 0.0
      %338 = vmatpush.msra.mxu0 0.0
      %339 = vmatpush.msra.mxu0 0.0
      %340 = vmatpush.msra.mxu0 0.0
      %341 = vmatpush.msra.mxu0 0.0
      %342 = vmatpush.msra.mxu0 0.0
      %343 = vmatpush.msra.mxu0 0.0
      %344 = vmatpush.msra.mxu0 0.0
      %345 = vmatpush.msra.mxu0 0.0
      %346 = vmatpush.msra.mxu0 0.0
      %347 = vmatpush.msra.mxu0 0.0
      %348 = vmatpush.msra.mxu0 0.0
      %349 = vmatpush.msra.mxu0 0.0
      %350 = vmatpush.msra.mxu0 0.0
      %351 = vmatpush.msra.mxu0 %v179
      %352 = vmatpush.msra.mxu0 %v167
      %353 = vmatmul.f32.gmra.mxu0 %v335
      %v354 = vpop.f32.mrf.mxu0
      %v355 = vadd.f32 %v171, %v354
      %356 = vdwg.mxu0
      %357 = vrot.lane.b32.xlu0 %v166, 108
      %v358 = vpop.permute.xlu0 %357
      %v360 = vsel %vm204, %v358, 0.0
      %v361 = vadd.f32 %v355, %v360
      %v362 = vxor.u32 %v355, 2147483648
      %v363 = vmul.f32 %v362, 1.442695
      %v364 = vpow.pop %v363
      %v365 = vadd.f32 %v364, 1.0
      %v366 = vrcp.pop %v365
      %v367 = vmul.f32 %v365, %v366
      %v368 = vsub.f32 1.0, %v367
      %v369 = vmul.f32 %v366, %v368
      %v370 = vadd.f32 %v366, %v369
      %vm371 = vweird.f32 %v365
      %vm372 = vweird.f32 %v366
      %vm373 = vmor %vm371, %vm372
      %v374 = vsel %vm373, %v366, %v370
      %v375 = vand.u32 2147483647, %v365
      %vm376 = vcmp.eq.f32.partialorder %v375, 8.507059e+37
      %v377 = vand.u32 %v365, 2147483648
      %v378 = vor.u32 1.1754944e-38, %v377
      %v379 = vsel %vm376, %v378, %v374
      %v380 = vmul.f32 1.0, %v379
      %382 = vrot.lane.b32.xlu0 %v380, 120
      %v383 = vpop.permute.xlu0 %382
      %v385 = vmul.f32 %v361, %v383
      %v386 = vsel %vm173, %v307, 0
      %388 = vmatpush.msra.mxu0 0.0
      %389 = vmatpush.msra.mxu0 0.0
      %390 = vmatpush.msra.mxu0 0.0
      %391 = vmatpush.msra.mxu0 0.0
      %392 = vmatpush.msra.mxu0 0.0
      %393 = vmatpush.msra.mxu0 0.0
      %394 = vmatpush.msra.mxu0 0.0
      %395 = vmatpush.msra.mxu0 0.0
      %396 = vmatpush.msra.mxu0 0.0
      %397 = vmatpush.msra.mxu0 0.0
      %398 = vmatpush.msra.mxu0 0.0
      %399 = vmatpush.msra.mxu0 0.0
      %400 = vmatpush.msra.mxu0 0.0
      %401 = vmatpush.msra.mxu0 0.0
      %402 = vmatpush.msra.mxu0 %v179
      %403 = vmatpush.msra.mxu0 %v167
      %404 = vmatmul.f32.gmra.mxu0 %v386
      %v405 = vpop.f32.mrf.mxu0
      %v406 = vadd.f32 %v171, %v405
      %407 = vdwg.mxu0
      %408 = vrot.lane.b32.xlu0 %v166, 104
      %v409 = vpop.permute.xlu0 %408
      %v411 = vsel %vm204, %v409, 0.0
      %v412 = vadd.f32 %v406, %v411
      %v413 = vxor.u32 %v406, 2147483648
      %v414 = vmul.f32 %v413, 1.442695
      %v415 = vpow.pop %v414
      %v416 = vadd.f32 %v415, 1.0
      %v417 = vrcp.pop %v416
      %v418 = vmul.f32 %v416, %v417
      %v419 = vsub.f32 1.0, %v418
      %v420 = vmul.f32 %v417, %v419
      %v421 = vadd.f32 %v417, %v420
      %vm422 = vweird.f32 %v416
      %vm423 = vweird.f32 %v417
      %vm424 = vmor %vm422, %vm423
      %v425 = vsel %vm424, %v417, %v421
      %v426 = vand.u32 2147483647, %v416
      %vm427 = vcmp.eq.f32.partialorder %v426, 8.507059e+37
      %v428 = vand.u32 %v416, 2147483648
      %v429 = vor.u32 1.1754944e-38, %v428
      %v430 = vsel %vm427, %v429, %v425
      %v431 = vmul.f32 1.0, %v430
      %433 = vrot.lane.b32.xlu0 %v431, 120
      %v434 = vpop.permute.xlu0 %433
      %v436 = vmul.f32 %v412, %v434
      %v437 = vsel %vm173, %v358, 0
      %439 = vmatpush.msra.mxu0 0.0
      %440 = vmatpush.msra.mxu0 0.0
      %441 = vmatpush.msra.mxu0 0.0
      %442 = vmatpush.msra.mxu0 0.0
      %443 = vmatpush.msra.mxu0 0.0
      %444 = vmatpush.msra.mxu0 0.0
      %445 = vmatpush.msra.mxu0 0.0
      %446 = vmatpush.msra.mxu0 0.0
      %447 = vmatpush.msra.mxu0 0.0
      %448 = vmatpush.msra.mxu0 0.0
      %449 = vmatpush.msra.mxu0 0.0
      %450 = vmatpush.msra.mxu0 0.0
      %451 = vmatpush.msra.mxu0 0.0
      %452 = vmatpush.msra.mxu0 0.0
      %453 = vmatpush.msra.mxu0 %v179
      %454 = vmatpush.msra.mxu0 %v167
      %455 = vmatmul.f32.gmra.mxu0 %v437
      %v456 = vpop.f32.mrf.mxu0
      %v457 = vadd.f32 %v171, %v456
      %458 = vdwg.mxu0
      %459 = vrot.lane.b32.xlu0 %v166, 100
      %v460 = vpop.permute.xlu0 %459
      %v462 = vsel %vm204, %v460, 0.0
      %v463 = vadd.f32 %v457, %v462
      %v464 = vxor.u32 %v457, 2147483648
      %v465 = vmul.f32 %v464, 1.442695
      %v466 = vpow.pop %v465
      %v467 = vadd.f32 %v466, 1.0
      %v468 = vrcp.pop %v467
      %v469 = vmul.f32 %v467, %v468
      %v470 = vsub.f32 1.0, %v469
      %v471 = vmul.f32 %v468, %v470
      %v472 = vadd.f32 %v468, %v471
      %vm473 = vweird.f32 %v467
      %vm474 = vweird.f32 %v468
      %vm475 = vmor %vm473, %vm474
      %v476 = vsel %vm475, %v468, %v472
      %v477 = vand.u32 2147483647, %v467
      %vm478 = vcmp.eq.f32.partialorder %v477, 8.507059e+37
      %v479 = vand.u32 %v467, 2147483648
      %v480 = vor.u32 1.1754944e-38, %v479
      %v481 = vsel %vm478, %v480, %v476
      %v482 = vmul.f32 1.0, %v481
      %484 = vrot.lane.b32.xlu0 %v482, 120
      %v485 = vpop.permute.xlu0 %484
      %v487 = vmul.f32 %v463, %v485
      %489 = vrot.lane.b32.xlu0 %v283, 8
      %v490 = vpop.permute.xlu0 %489
      %493 = vrot.lane.b32.xlu0 %v334, 16
      %v494 = vpop.permute.xlu0 %493
      %497 = vrot.lane.b32.xlu0 %v385, 24
      %v498 = vpop.permute.xlu0 %497
      %501 = vrot.lane.b32.xlu0 %v436, 32
      %v502 = vpop.permute.xlu0 %501
      %505 = vrot.lane.b32.xlu0 %v487, 40
      %v506 = vpop.permute.xlu0 %505
      %vm508 = vcmask 64512
      %v509 = vsel %vm508, %v230, %v490
      %vm510 = vcmask 130048
      %v511 = vsel %vm510, %v509, %v494
      %vm512 = vcmask 195584
      %v513 = vsel %vm512, %v511, %v498
      %vm514 = vcmask 261120
      %v515 = vsel %vm514, %v513, %v502
      %vm516 = vcmask 326656
      %v517 = vsel %vm516, %v515, %v506
      %vm518 = vcmask 392192
      %519 = vst.msk [vmem:[%s165] sm:$0xff] %vm518, %v517
      %p520 = scmp.lt.s32.totalorder %s14, 3
      %s521 = scalar_select %p520, %s14, 3
      %s522 = smul.addr %s521, 8
      %s523 = scalar_lea.vmem %s3, %s522
      // Predicated region
      $region33: #{temporal_layer_pallas.1} parent=31 // pred_check
        %p524 = pneg %p100
      $region34: #{temporal_layer_pallas.1} parent=31 // pred_check_branch
        %526 = sbr.rel (%p524) target = $region36
      $region35: #{temporal_layer_pallas.1} parent=31 // pred_region
        _
      $region36: #{temporal_layer_pallas.1} parent=31 // pred_fallthru
        _
    $region32: #{temporal_layer_pallas.1} parent=5 // pred_fallthru
      _
    %p527 = scmp.le.s32.totalorder 2, %s9
    // Predicated region
    $region37: #{temporal_layer_pallas.1} parent=5 // pred_check
      %p528 = pneg %p527
    $region38: #{temporal_layer_pallas.1} parent=5 // pred_check_branch
      %530 = sbr.rel (%p528) target = $region40
    $region39: #{temporal_layer_pallas.1} parent=5 // pred_region
      %s531 = ssub.s32 %s9, 2
      // Predicated region
      $region41: #{temporal_layer_pallas.1} parent=39 // pred_check
        %p532 = pneg %p106
      $region42: #{temporal_layer_pallas.1} parent=39 // pred_check_branch
        %534 = sbr.rel (%p532) target = $region44
      $region43: #{temporal_layer_pallas.1} parent=39 // pred_region
        %p535 = scmp.lt.s32.totalorder %s15, 3
        %s536 = scalar_select %p535, %s15, 3
        %s537 = smul.addr %s536, 8
        %s538 = scalar_lea.vmem %s3, %s537
      $region44: #{temporal_layer_pallas.1} parent=39 // pred_fallthru
        _
    $region40: #{temporal_layer_pallas.1} parent=5 // pred_fallthru
      _
  $region6: #{temporal_layer_pallas.1} parent=0 // loop_footer
    %s13 = sadd.s32 1, %s9
  $region7: #{temporal_layer_pallas.1} parent=0 // loop_footer_branch
    %8 = sbr.rel target = $region3
  $region8: #{temporal_layer_pallas.1} parent=0 // loop_exit
    _

</llo_original>
